<compile_context>
chip_gen: v5e
topology: v5e:2x2
jax: 0.10.0
libtpu: 0.0.40
codegen_flags: <defaults>
</compile_context>

<pallas_src>
import functools
import math

import jax
import jax.numpy as jnp
from jax.experimental import pallas as pl
from jax.experimental.pallas import tpu as pltpu


def _linear_kernel(*refs, has_mask, has_bias, multi_k, mask_select):
    """One (tm, tn) output tile of x @ masked_w.T (+ bias).

    Ref order: x (tm,tk), w (tn,tk), [mask (tn,tk)], [bias (1,tn)], out (tm,tn),
    [acc (tm,tn) f32 scratch — only when the K grid axis has > 1 step].
    """
    it = iter(refs)
    x_ref = next(it)
    w_ref = next(it)
    m_ref = next(it) if has_mask else None
    b_ref = next(it) if has_bias else None
    o_ref = next(it)
    acc_ref = next(it) if multi_k else None

    w = w_ref[...]
    if has_mask:
        m = m_ref[...]
        if mask_select:
            # Bit-select is dtype-agnostic: avoids int8->weight-dtype convert +
            # multiply VALU work (v5e has no bf16 VALU); hides under the
            # weight-tile DMA.
            w = jnp.where(m != 0, w, jnp.zeros_like(w))
        else:
            w = w * m.astype(w.dtype)

    # Contract the K (lane) dim of both operands: the MXU consumes the (tn, tk)
    # weight tile directly, no `.T` / per-K-step relayout.
    # TODO(synk): verify via pl.lower_as_mlir that no vxpose is emitted on
    # v5e's 4x128 MXU; if it is, store the parameter once in (K, N) layout.
    part = jax.lax.dot_general(
        x_ref[...], w,
        dimension_numbers=(((1,), (1,)), ((), ())),
        preferred_element_type=jnp.float32)

    if multi_k:
        k = pl.program_id(2)

        @pl.when(k == 0)
        def _():
            acc_ref[...] = jnp.zeros_like(acc_ref)

        acc_ref[...] += part

        @pl.when(k == pl.num_programs(2) - 1)
        def _():
            res = acc_ref[...]
            if has_bias:
                res = res + b_ref[...].astype(jnp.float32)
            o_ref[...] = res.astype(o_ref.dtype)
    else:
        # Single K step: no f32 scratch, write the output tile directly.
        res = part
        if has_bias:
            res = res + b_ref[...].astype(jnp.float32)
        o_ref[...] = res.astype(o_ref.dtype)


def _pick_tile(dim, cap, unit):
    """Largest tile <= cap that divides `dim` and is a multiple of `unit`.

    Falls back to the full dim (legal: a block equal to the full array dim
    bypasses the (8,128) rule) when dim <= cap or no aligned divisor exists;
    the VMEM limit below is sized from the actual tiles either way.
    """
    if dim <= cap:
        return dim
    t = (cap // unit) * unit
    while t >= unit:
        if dim % t == 0:
            return t
        t -= unit
    return dim


def _tpu_vmem_capacity_bytes():
    """Physical VMEM per TensorCore, or None if it cannot be queried."""
    try:
        info = pltpu.get_tpu_info()
        cap = getattr(info, "vmem_capacity_bytes", None)
        return int(cap) if cap else None
    except Exception:
        return None


def dense_linear_forward(x, weight, mask=None, bias=None, *,
                         tm=None, tn=None, tk=None,
                         prefuse_mask=None, compute_dtype=None):
    """Pallas implementation of DenseLinear.forward.

    mask=None -> use_mask=False semantics; bias=None -> use_bias=False.
    compute_dtype=jnp.bfloat16 runs the matmul stream in bf16 with f32
    accumulation. NOTE: this only pays off when `weight` is already stored in
    bf16 (or it is re-streamed >= ~3x per call); otherwise the per-call
    f32->bf16 cast adds ~1.5x the f32 weight bytes of HBM traffic.
    Shapes must be tile-divisible (no padding/masking path).
    """
    B, K = x.shape
    N, K2 = weight.shape
    assert K == K2, "in_features mismatch"
    if mask is not None:
        assert mask.shape == weight.shape, "mask must match weight shape"

    out_dtype = x.dtype
    if compute_dtype is not None:
        if x.dtype != compute_dtype:
            x = x.astype(compute_dtype)
        if weight.dtype != compute_dtype:
            weight = weight.astype(compute_dtype)

    # ---- generation-aware sizing -------------------------------------------
    vmem_cap = _tpu_vmem_capacity_bytes()
    big_vmem = vmem_cap is not None and vmem_cap >= (100 << 20)   # v5e / v6e
    is_v7x_like = vmem_cap is not None and vmem_cap <= (80 << 20)  # 64 MiB / TC
    nk_cap = 1024 if big_vmem else 512
    vmem_ceiling = (100 << 20) if big_vmem else (44 << 20)

    tm_given, tn_given = tm is not None, tn is not None
    if tm is None:
        # tm bounds VMEM growth with batch; 512 keeps the FLOP/streamed-weight-
        # byte ratio above the HBM/MXU crossover on all three generations.
        tm = _pick_tile(B, 512, 8)
    if tk is None:
        tk = _pick_tile(K, nk_cap, 128)
    if tn is None:
        tn = _pick_tile(N, nk_cap, 128)

    # v7x: 2 TensorCores are sharded over the "parallel" grid axes. If both
    # parallel axes are degenerate, split the larger of B / N so neither core
    # idles, keeping tiles legal (tm multiple of 8, tn multiple of 128).
    if is_v7x_like and not tm_given and not tn_given \
            and B // tm == 1 and N // tn == 1:
        can_split_n = N >= 256 and (N // 2) % 128 == 0
        can_split_b = B >= 16 and (B // 2) % 8 == 0
        if can_split_n and (N >= B or not can_split_b):
            tn = N // 2
        elif can_split_b:
            tm = B // 2

    assert B % tm == 0 and N % tn == 0 and K % tk == 0, (
        f"shape ({B},{K})x({N},{K}) not divisible by tiles ({tm},{tn},{tk}); "
        "pad inputs or pass explicit tm/tn/tk")

    restream = B // tm          # times each weight tile is re-streamed from HBM
    kt = K // tk
    multi_k = kt > 1

    # ---- mask handling -------------------------------------------------------
    # Prefusing (weight*mask once in XLA) costs ~2.25x weight bytes (read W +
    # mask, write W); streaming the int8 mask in-kernel costs 0.25x weight
    # bytes per batch tile. Break-even ~8 re-streams for f32, ~4 for bf16.
    if prefuse_mask is None:
        w_is_f32 = jnp.dtype(weight.dtype).itemsize >= 4
        prefuse_mask = restream >= (8 if w_is_f32 else 4)

    mask_op = None
    mask_select = False
    if mask is not None:
        if prefuse_mask:
            weight = weight * mask.astype(weight.dtype)
        elif mask.dtype == jnp.bool_:
            # {0,1} guaranteed: stream as int8 (25% of f32 bytes), bit-select.
            mask_op = mask.astype(jnp.int8)
            mask_select = True
        else:
            # Non-boolean masks may be non-binary: keep exact multiply
            # semantics and stream in the weight dtype.
            mask_op = mask.astype(weight.dtype)

    has_mask = mask_op is not None
    has_bias = bias is not None
    bias_2d = bias.reshape(1, N) if has_bias else None

    grid = (B // tm, N // tn, kt)

    in_specs = [pl.BlockSpec((tm, tk), lambda i, j, k: (i, k)),
                pl.BlockSpec((tn, tk), lambda i, j, k: (j, k))]
    operands = [x, weight]
    if has_mask:
        in_specs.append(pl.BlockSpec((tn, tk), lambda i, j, k: (j, k)))
        operands.append(mask_op)
    if has_bias:
        in_specs.append(pl.BlockSpec((1, tn), lambda i, j, k: (0, j)))
        operands.append(bias_2d)
    out_spec = pl.BlockSpec((tm, tn), lambda i, j, k: (i, j))

    scratch_shapes = [pltpu.VMEM((tm, tn), jnp.float32)] if multi_k else []

    # ---- VMEM budget / scoped limit -----------------------------------------
    isz = lambda a: jnp.dtype(a.dtype).itemsize
    budget = 2 * (tm * tk * isz(x) + tn * tk * isz(weight))   # double-buffered
    if has_mask:
        budget += 2 * tn * tk * isz(mask_op)
    if has_bias:
        budget += 2 * tn * isz(bias_2d)
    budget += 2 * tm * tn * jnp.dtype(out_dtype).itemsize
    if multi_k:
        budget += tm * tn * 4                                  # f32 accumulator
    vmem_limit = int(min(max(budget * 3 // 2 + (4 << 20), 16 << 20),
                         vmem_ceiling))

    kernel = functools.partial(_linear_kernel, has_mask=has_mask,
                               has_bias=has_bias, multi_k=multi_k,
                               mask_select=mask_select)

    return pl.pallas_call(
        kernel,
        out_shape=jax.ShapeDtypeStruct((B, N), out_dtype),
        grid_spec=pltpu.PrefetchScalarGridSpec(
            num_scalar_prefetch=0,
            grid=grid,
            in_specs=in_specs,
            out_specs=out_spec,
            scratch_shapes=scratch_shapes),
        compiler_params=pltpu.CompilerParams(
            dimension_semantics=("parallel", "parallel", "arbitrary"),
            vmem_limit_bytes=vmem_limit),
    )(*operands)


def init_dense_linear_params(key, in_features, out_features, dtype=jnp.float32):
    """Deterministic re-implementation of DenseLinear.reset_parameters.

    kaiming_uniform_(a=sqrt(5)) on a (out, in) weight gives bound = 1/sqrt(fan_in);
    bias uniform in (-1/sqrt(fan_in), 1/sqrt(fan_in)).
    """
    kw, kb = jax.random.split(key)
    fan_in = in_features
    w_bound = math.sqrt(6.0 / ((1.0 + 5.0) * fan_in))   # = 1/sqrt(fan_in)
    b_bound = 1.0 / math.sqrt(fan_in)
    weight = jax.random.uniform(kw, (out_features, in_features),
                                minval=-w_bound, maxval=w_bound, dtype=dtype)
    bias = jax.random.uniform(kb, (out_features,),
                              minval=-b_bound, maxval=b_bound, dtype=dtype)
    return weight, bias


# TODO(synk): SparseLinear (COO sparse addmm) and the prune_by_* /
# random_prune_by_pct / to_sparse methods are host-side parameter management,
# not part of the dense forward pass; not translated.

if __name__ == "__main__":
    key = jax.random.PRNGKey(0)
    k_param, k_x, k_mask = jax.random.split(key, 3)

    batch = 16
    in_features = 256
    out_features = 128

    weight, bias = init_dense_linear_params(k_param, in_features, out_features)
    x = jax.random.normal(k_x, (batch, in_features), dtype=jnp.float32)

    # DenseLinear starts with an all-ones mask; use a pruned bool mask here to
    # exercise the masking path (same semantics: weight * mask).
    mask = jax.random.bernoulli(k_mask, p=0.7, shape=(out_features, in_features))

    # High-precision references; kernel runs at default MXU precision, so allow
    # a small bf16-pass tolerance.
    ref = jnp.dot(x, (weight * mask.astype(weight.dtype)).T,
                  precision=jax.lax.Precision.HIGHEST) + bias[None, :]
    ref_plain = jnp.dot(x, weight.T, precision=jax.lax.Precision.HIGHEST)
    tol = dict(atol=2e-2, rtol=2e-2)

    # 1) bool mask streamed as int8 + bit-select in-kernel, single K tile
    #    (no-accumulator fast path).
    out = jax.block_until_ready(dense_linear_forward(x, weight, mask, bias))
    assert out.shape == (batch, out_features)
    assert jnp.allclose(out, ref, **tol)

    # 2) multi-K accumulator path (tk=128 -> 2 K steps, f32 scratch).
    out_k = jax.block_until_ready(
        dense_linear_forward(x, weight, mask, bias, tk=128))
    assert jnp.allclose(out_k, ref, **tol)

    # 3) mask pre-fused into the weight in the wrapper (path taken
    #    automatically only when the weight is re-streamed >= 8x).
    out_fused = jax.block_until_ready(
        dense_linear_forward(x, weight, mask, bias, prefuse_mask=True))
    assert jnp.allclose(out_fused, ref, **tol)

    # 4) use_mask=False / use_bias=False semantics (no mask/bias streams).
    out_plain = jax.block_until_ready(dense_linear_forward(x, weight, None, None))
    assert jnp.allclose(out_plain, ref_plain, **tol)

    print("KERNEL_OK")
</pallas_src>

<mosaic_0001>
module attributes {stable_mosaic.version = 11 : i64} {
  func.func @_linear_kernel(%arg0: i32, %arg1: i32, %arg2: i32, %arg3: memref<16x256xf32, #tpu.memory_space<vmem>>, %arg4: memref<128x256xf32, #tpu.memory_space<vmem>>, %arg5: memref<128x256xi8, #tpu.memory_space<vmem>>, %arg6: memref<1x128xf32, #tpu.memory_space<vmem>>, %arg7: memref<16x128xf32, #tpu.memory_space<vmem>>) attributes {dimension_semantics = [#tpu.dimension_semantics<parallel>, #tpu.dimension_semantics<parallel>, #tpu.dimension_semantics<arbitrary>], iteration_bounds = array<i64: 1, 1, 1>, scalar_prefetch = 0 : i64, scratch_operands = 0 : i64, tpu.core_type = #tpu.core_type<tc>, window_params = [{transform_indices = @transform_0, window_bounds = array<i64: 16, 256>}, {transform_indices = @transform_1, window_bounds = array<i64: 128, 256>}, {transform_indices = @transform_2, window_bounds = array<i64: 128, 256>}, {transform_indices = @transform_3, window_bounds = array<i64: 1, 128>}, {transform_indices = @transform_4, window_bounds = array<i64: 16, 128>}]} {
    %c0 = arith.constant 0 : index
    %c0_0 = arith.constant 0 : index
    %0 = vector.load %arg4[%c0, %c0_0] : memref<128x256xf32, #tpu.memory_space<vmem>>, vector<128x256xf32>
    %c0_1 = arith.constant 0 : index
    %c0_2 = arith.constant 0 : index
    %1 = vector.load %arg5[%c0_1, %c0_2] : memref<128x256xi8, #tpu.memory_space<vmem>>, vector<128x256xi8>
    %c0_i8 = arith.constant 0 : i8
    %2 = vector.broadcast %c0_i8 : i8 to vector<128x256xi8>
    %3 = arith.cmpi ne, %1, %2 : vector<128x256xi8>
    %cst = arith.constant 0.000000e+00 : f32
    %4 = vector.broadcast %cst : f32 to vector<128x256xf32>
    %5 = arith.select %3, %0, %4 : vector<128x256xi1>, vector<128x256xf32>
    %c0_3 = arith.constant 0 : index
    %c0_4 = arith.constant 0 : index
    %6 = vector.load %arg3[%c0_3, %c0_4] : memref<16x256xf32, #tpu.memory_space<vmem>>, vector<16x256xf32>
    %cst_5 = arith.constant dense<0.000000e+00> : vector<16x128xf32>
    %7 = tpu.matmul %6, %5, %cst_5 {dimension_numbers = #tpu.dot_dimension_numbers<[1], [1], [0], [0], [0, 0, 1, 0], [], []>} : vector<16x256xf32>, vector<128x256xf32>, vector<16x128xf32> -> vector<16x128xf32>
    %c0_6 = arith.constant 0 : index
    %c0_7 = arith.constant 0 : index
    %8 = vector.load %arg6[%c0_6, %c0_7] : memref<1x128xf32, #tpu.memory_space<vmem>>, vector<1x128xf32>
    %9 = vector.broadcast %8 : vector<1x128xf32> to vector<16x128xf32>
    %10 = arith.addf %7, %9 : vector<16x128xf32>
    %c0_8 = arith.constant 0 : index
    %c0_9 = arith.constant 0 : index
    %11 = vector.load %arg7[%c0_8, %c0_9] : memref<16x128xf32, #tpu.memory_space<vmem>>, vector<16x128xf32>
    tpu.vector_store %arg7[%c0_8, %c0_9], %10 {strides = array<i32>} : memref<16x128xf32, #tpu.memory_space<vmem>>, vector<16x128xf32>,
    return
  }
  func.func @transform_0(%arg0: i32, %arg1: i32, %arg2: i32) -> (i32, i32) {
    %c0_i32 = arith.constant 0 : i32
    return %arg0, %arg2 : i32, i32
  }
  func.func @transform_1(%arg0: i32, %arg1: i32, %arg2: i32) -> (i32, i32) {
    %c0_i32 = arith.constant 0 : i32
    return %arg1, %arg2 : i32, i32
  }
  func.func @transform_2(%arg0: i32, %arg1: i32, %arg2: i32) -> (i32, i32) {
    %c0_i32 = arith.constant 0 : i32
    return %arg1, %arg2 : i32, i32
  }
  func.func @transform_3(%arg0: i32, %arg1: i32, %arg2: i32) -> (i32, i32) {
    %c0_i32 = arith.constant 0 : i32
    %c0_i32_0 = arith.constant 0 : i32
    return %c0_i32, %arg1 : i32, i32
  }
  func.func @transform_4(%arg0: i32, %arg1: i32, %arg2: i32) -> (i32, i32) {
    %c0_i32 = arith.constant 0 : i32
    return %arg0, %arg1 : i32, i32
  }
}

</mosaic_0001>

<llo_original>
// kernel: tpu_custom_call.1
$region0: #{tpu_custom_call.1}
  #allocation0 [shape = 'u32[]', space=smem, size = 0x4, offset = 0x4, fixed_abs, tag = 'smem constant byte address 0x4 - core index']
  #allocation1 [shape = 'u32[72,128]{1,0:T(1,128)}', space=vmem, size = 0x9000, scoped, tag = 'internal scratch']
  %s0 = inlined_call_operand.hbm [shape: f32[16,256], index: 0, kind: input, shape index: {}]
  %s1 = inlined_call_operand.hbm [shape: f32[128,256], index: 1, kind: input, shape index: {}]
  %s2 = inlined_call_operand.hbm [shape: s8[128,256], index: 2, kind: input, shape index: {}]
  %s3 = inlined_call_operand.vmem [shape: f32[1,128], index: 3, kind: input, shape index: {}]
  %s4 = inlined_call_operand.hbm [shape: f32[16,128], index: 4, kind: output, shape index: {}]
  %s5 = sld [smem:[#allocation0]]
  $region38: #{tpu_custom_call.1} parent=0
    _
  %s7 = ssub.s32 1, %s5
  %s8 = scalar_select 0, %s7, %s5
  $region1: #{tpu_custom_call.1} parent=0
    #allocation2 [shape = 'u8[16384]{0}', space=vmem, size = 0x4000, scoped, tag = 'input window, operand 0, single buffered']
    #allocation3 [shape = 's32[1]{0}', space=sflag, size = 0x4, scoped, tag = 'scoped memory for tpu_custom_call.1']
    #allocation4 [shape = 's32[1]{0}', space=sflag, size = 0x4, scoped, tag = 'scoped memory for tpu_custom_call.1']
    #allocation5 [shape = 'u8[131072]{0}', space=vmem, size = 0x20000, scoped, tag = 'input window, operand 1, single buffered']
    #allocation6 [shape = 's32[1]{0}', space=sflag, size = 0x4, scoped, tag = 'scoped memory for tpu_custom_call.1']
    #allocation7 [shape = 'u8[32768]{0}', space=vmem, size = 0x8000, scoped, tag = 'input window, operand 2, single buffered']
    #allocation8 [shape = 'u8[8192]{0}', space=vmem, size = 0x2000, scoped, tag = 'output window, operand 0, single buffered']
    %9 = vsyncpa [#allocation3], 0
    %10 = vsyncpa [#allocation6], 0
    %11 = vsyncpa [#allocation4], 0
    // Predicated region
    $region2: #{tpu_custom_call.1} parent=1 // pred_check
      _
    $region3: #{tpu_custom_call.1} parent=1 // pred_check_branch
      %13 = sbr.rel (0) target = $region5
    $region4: #{tpu_custom_call.1} parent=1 // pred_region
      %15 = vsyncadd [#allocation3], 0
      %s16 = sshll.u32 %s0, 4
      %s17 = int_to_ptr.hbm [resolvable:$true] %s16
      %s18 = sshll.u32 [#allocation2], 4
      %s19 = int_to_ptr.vmem [resolvable:$true] %s18
      %24 = dma.hbm_to_vmem [thread:$0]  %s17, 512, %s19, [#allocation3], 256, 256, 16
    $region5: #{tpu_custom_call.1} parent=1 // pred_fallthru
      _
    // Predicated region
    $region6: #{tpu_custom_call.1} parent=1 // pred_check
      _
    $region7: #{tpu_custom_call.1} parent=1 // pred_check_branch
      %26 = sbr.rel (0) target = $region9
    $region8: #{tpu_custom_call.1} parent=1 // pred_region
      %28 = vsyncadd [#allocation6], 0
      %s29 = sshll.u32 %s1, 4
      %s30 = int_to_ptr.hbm [resolvable:$true] %s29
      %s31 = sshll.u32 [#allocation5], 4
      %s32 = int_to_ptr.vmem [resolvable:$true] %s31
      %37 = dma.hbm_to_vmem [thread:$0]  %s30, 4096, %s32, [#allocation6], 256, 256, 16
    $region9: #{tpu_custom_call.1} parent=1 // pred_fallthru
      _
    // Predicated region
    $region10: #{tpu_custom_call.1} parent=1 // pred_check
      _
    $region11: #{tpu_custom_call.1} parent=1 // pred_check_branch
      %39 = sbr.rel (0) target = $region13
    $region12: #{tpu_custom_call.1} parent=1 // pred_region
      %41 = vsyncadd [#allocation6], 0
      %s42 = sshll.u32 %s2, 4
      %s43 = int_to_ptr.hbm [resolvable:$true] %s42
      %s44 = sshll.u32 [#allocation7], 4
      %s45 = int_to_ptr.vmem [resolvable:$true] %s44
      %50 = dma.hbm_to_vmem [thread:$0]  %s43, 1024, %s45, [#allocation6], 256, 256, 16
    $region13: #{tpu_custom_call.1} parent=1 // pred_fallthru
      _
    // Predicated region
    $region14: #{tpu_custom_call.1} parent=1 // pred_check
      _
    $region15: #{tpu_custom_call.1} parent=1 // pred_check_branch
      %52 = sbr.rel (0) target = $region17
    $region16: #{tpu_custom_call.1} parent=1 // pred_region
      _
    $region17: #{tpu_custom_call.1} parent=1 // pred_fallthru
      _
    // Predicated region
    $region18: #{tpu_custom_call.1} parent=1 // pred_check
      _
    $region19: #{tpu_custom_call.1} parent=1 // pred_check_branch
      %54 = sbr.rel (0) target = $region21
    $region20: #{tpu_custom_call.1} parent=1 // pred_region
      %56 = dma.done [#allocation3], 512
    $region21: #{tpu_custom_call.1} parent=1 // pred_fallthru
      _
    // Predicated region
    $region22: #{tpu_custom_call.1} parent=1 // pred_check
      _
    $region23: #{tpu_custom_call.1} parent=1 // pred_check_branch
      %58 = sbr.rel (0) target = $region25
    $region24: #{tpu_custom_call.1} parent=1 // pred_region
      %60 = dma.done [#allocation6], 4096
    $region25: #{tpu_custom_call.1} parent=1 // pred_fallthru
      _
    // Predicated region
    $region26: #{tpu_custom_call.1} parent=1 // pred_check
      _
    $region27: #{tpu_custom_call.1} parent=1 // pred_check_branch
      %62 = sbr.rel (0) target = $region29
    $region28: #{tpu_custom_call.1} parent=1 // pred_region
      %64 = dma.done [#allocation6], 1024
    $region29: #{tpu_custom_call.1} parent=1 // pred_fallthru
      _
    %v67 = vld [vmem:[#allocation5] sm:$0xff]
    %v68 = vld [vmem:[#allocation5 + $0x8] sm:$0xff]
    %v69 = vld [vmem:[#allocation5 + $0x10] sm:$0xff]
    %v70 = vld [vmem:[#allocation5 + $0x18] sm:$0xff]
    %v71 = vld [vmem:[#allocation5 + $0x20] sm:$0xff]
    %v72 = vld [vmem:[#allocation5 + $0x28] sm:$0xff]
    %v73 = vld [vmem:[#allocation5 + $0x30] sm:$0xff]
    %v74 = vld [vmem:[#allocation5 + $0x38] sm:$0xff]
    %v75 = vld [vmem:[#allocation5 + $0x40] sm:$0xff]
    %v76 = vld [vmem:[#allocation5 + $0x48] sm:$0xff]
    %v77 = vld [vmem:[#allocation5 + $0x50] sm:$0xff]
    %v78 = vld [vmem:[#allocation5 + $0x58] sm:$0xff]
    %v79 = vld [vmem:[#allocation5 + $0x60] sm:$0xff]
    %v80 = vld [vmem:[#allocation5 + $0x68] sm:$0xff]
    %v81 = vld [vmem:[#allocation5 + $0x70] sm:$0xff]
    %v82 = vld [vmem:[#allocation5 + $0x78] sm:$0xff]
    %v83 = vld [vmem:[#allocation5 + $0x80] sm:$0xff]
    %v84 = vld [vmem:[#allocation5 + $0x88] sm:$0xff]
    %v85 = vld [vmem:[#allocation5 + $0x90] sm:$0xff]
    %v86 = vld [vmem:[#allocation5 + $0x98] sm:$0xff]
    %v87 = vld [vmem:[#allocation5 + $0xa0] sm:$0xff]
    %v88 = vld [vmem:[#allocation5 + $0xa8] sm:$0xff]
    %v89 = vld [vmem:[#allocation5 + $0xb0] sm:$0xff]
    %v90 = vld [vmem:[#allocation5 + $0xb8] sm:$0xff]
    %v91 = vld [vmem:[#allocation5 + $0xc0] sm:$0xff]
    %v92 = vld [vmem:[#allocation5 + $0xc8] sm:$0xff]
    %v93 = vld [vmem:[#allocation5 + $0xd0] sm:$0xff]
    %v94 = vld [vmem:[#allocation5 + $0xd8] sm:$0xff]
    %v95 = vld [vmem:[#allocation5 + $0xe0] sm:$0xff]
    %v96 = vld [vmem:[#allocation5 + $0xe8] sm:$0xff]
    %v97 = vld [vmem:[#allocation5 + $0xf0] sm:$0xff]
    %v98 = vld [vmem:[#allocation5 + $0xf8] sm:$0xff]
    %v99 = vld [vmem:[#allocation7] sm:$0xff]
    %v100 = vld [vmem:[#allocation7 + $0x8] sm:$0xff]
    %v101 = vld [vmem:[#allocation7 + $0x10] sm:$0xff]
    %v102 = vld [vmem:[#allocation7 + $0x18] sm:$0xff]
    %v103 = vld [vmem:[#allocation7 + $0x20] sm:$0xff]
    %v104 = vld [vmem:[#allocation7 + $0x28] sm:$0xff]
    %v105 = vld [vmem:[#allocation7 + $0x30] sm:$0xff]
    %v106 = vld [vmem:[#allocation7 + $0x38] sm:$0xff]
    %vm107 = vnez %v99
    %vm108 = vnez %v100
    %vm109 = vnez %v101
    %vm110 = vnez %v102
    %vm111 = vnez %v103
    %vm112 = vnez %v104
    %vm113 = vnez %v105
    %vm114 = vnez %v106
    %v115 = vsel %vm107, 16843009, 0
    %v116 = vsel %vm108, 16843009, 0
    %v117 = vsel %vm109, 16843009, 0
    %v118 = vsel %vm110, 16843009, 0
    %v119 = vsel %vm111, 16843009, 0
    %v120 = vsel %vm112, 16843009, 0
    %v121 = vsel %vm113, 16843009, 0
    %v122 = vsel %vm114, 16843009, 0
    %v123 = vunpack.c.0.s8 %v115
    %v124 = vunpack.c.0.s8 %v116
    %v125 = vunpack.c.1.s8 %v115
    %v126 = vunpack.c.1.s8 %v116
    %v127 = vunpack.c.2.s8 %v115
    %v128 = vunpack.c.2.s8 %v116
    %v129 = vunpack.c.3.s8 %v115
    %v130 = vunpack.c.3.s8 %v116
    %v131 = vunpack.c.0.s8 %v117
    %v132 = vunpack.c.0.s8 %v118
    %v133 = vunpack.c.1.s8 %v117
    %v134 = vunpack.c.1.s8 %v118
    %v135 = vunpack.c.2.s8 %v117
    %v136 = vunpack.c.2.s8 %v118
    %v137 = vunpack.c.3.s8 %v117
    %v138 = vunpack.c.3.s8 %v118
    %v139 = vunpack.c.0.s8 %v119
    %v140 = vunpack.c.0.s8 %v120
    %v141 = vunpack.c.1.s8 %v119
    %v142 = vunpack.c.1.s8 %v120
    %v143 = vunpack.c.2.s8 %v119
    %v144 = vunpack.c.2.s8 %v120
    %v145 = vunpack.c.3.s8 %v119
    %v146 = vunpack.c.3.s8 %v120
    %v147 = vunpack.c.0.s8 %v121
    %v148 = vunpack.c.0.s8 %v122
    %v149 = vunpack.c.1.s8 %v121
    %v150 = vunpack.c.1.s8 %v122
    %v151 = vunpack.c.2.s8 %v121
    %v152 = vunpack.c.2.s8 %v122
    %v153 = vunpack.c.3.s8 %v121
    %v154 = vunpack.c.3.s8 %v122
    %v155 = vpack.c.b16 %v124, %v123
    %v156 = vpack.c.b8 %v155, %v155
    %v157 = vpack.c.b16 %v126, %v125
    %v158 = vpack.c.b8 %v157, %v157
    %v159 = vpack.c.b16 %v128, %v127
    %v160 = vpack.c.b8 %v159, %v159
    %v161 = vpack.c.b16 %v130, %v129
    %v162 = vpack.c.b8 %v161, %v161
    %v163 = vpack.c.b16 %v132, %v131
    %v164 = vpack.c.b8 %v163, %v163
    %v165 = vpack.c.b16 %v134, %v133
    %v166 = vpack.c.b8 %v165, %v165
    %v167 = vpack.c.b16 %v136, %v135
    %v168 = vpack.c.b8 %v167, %v167
    %v169 = vpack.c.b16 %v138, %v137
    %v170 = vpack.c.b8 %v169, %v169
    %v171 = vpack.c.b16 %v140, %v139
    %v172 = vpack.c.b8 %v171, %v171
    %v173 = vpack.c.b16 %v142, %v141
    %v174 = vpack.c.b8 %v173, %v173
    %v175 = vpack.c.b16 %v144, %v143
    %v176 = vpack.c.b8 %v175, %v175
    %v177 = vpack.c.b16 %v146, %v145
    %v178 = vpack.c.b8 %v177, %v177
    %v179 = vpack.c.b16 %v148, %v147
    %v180 = vpack.c.b8 %v179, %v179
    %v181 = vpack.c.b16 %v150, %v149
    %v182 = vpack.c.b8 %v181, %v181
    %v183 = vpack.c.b16 %v152, %v151
    %v184 = vpack.c.b8 %v183, %v183
    %v185 = vpack.c.b16 %v154, %v153
    %v186 = vpack.c.b8 %v185, %v185
    %vm187 = vnez %v156
    %vm188 = vnez %v158
    %vm189 = vnez %v160
    %vm190 = vnez %v162
    %vm191 = vnez %v164
    %vm192 = vnez %v166
    %vm193 = vnez %v168
    %vm194 = vnez %v170
    %vm195 = vnez %v172
    %vm196 = vnez %v174
    %vm197 = vnez %v176
    %vm198 = vnez %v178
    %vm199 = vnez %v180
    %vm200 = vnez %v182
    %vm201 = vnez %v184
    %vm202 = vnez %v186
    %v203 = vsel %vm187, 16843009, 0
    %v204 = vsel %vm188, 16843009, 0
    %v205 = vsel %vm189, 16843009, 0
    %v206 = vsel %vm190, 16843009, 0
    %v207 = vsel %vm191, 16843009, 0
    %v208 = vsel %vm192, 16843009, 0
    %v209 = vsel %vm193, 16843009, 0
    %v210 = vsel %vm194, 16843009, 0
    %v211 = vsel %vm195, 16843009, 0
    %v212 = vsel %vm196, 16843009, 0
    %v213 = vsel %vm197, 16843009, 0
    %v214 = vsel %vm198, 16843009, 0
    %v215 = vsel %vm199, 16843009, 0
    %v216 = vsel %vm200, 16843009, 0
    %v217 = vsel %vm201, 16843009, 0
    %v218 = vsel %vm202, 16843009, 0
    %v219 = vunpack.c.0.s8 %v203
    %v220 = vunpack.c.1.s8 %v203
    %v221 = vunpack.c.0.s8 %v204
    %v222 = vunpack.c.1.s8 %v204
    %v223 = vunpack.c.0.s8 %v205
    %v224 = vunpack.c.1.s8 %v205
    %v225 = vunpack.c.0.s8 %v206
    %v226 = vunpack.c.1.s8 %v206
    %v227 = vunpack.c.0.s8 %v207
    %v228 = vunpack.c.1.s8 %v207
    %v229 = vunpack.c.0.s8 %v208
    %v230 = vunpack.c.1.s8 %v208
    %v231 = vunpack.c.0.s8 %v209
    %v232 = vunpack.c.1.s8 %v209
    %v233 = vunpack.c.0.s8 %v210
    %v234 = vunpack.c.1.s8 %v210
    %v235 = vunpack.c.0.s8 %v211
    %v236 = vunpack.c.1.s8 %v211
    %v237 = vunpack.c.0.s8 %v212
    %v238 = vunpack.c.1.s8 %v212
    %v239 = vunpack.c.0.s8 %v213
    %v240 = vunpack.c.1.s8 %v213
    %v241 = vunpack.c.0.s8 %v214
    %v242 = vunpack.c.1.s8 %v214
    %v243 = vunpack.c.0.s8 %v215
    %v244 = vunpack.c.1.s8 %v215
    %v245 = vunpack.c.0.s8 %v216
    %v246 = vunpack.c.1.s8 %v216
    %v247 = vunpack.c.0.s8 %v217
    %v248 = vunpack.c.1.s8 %v217
    %v249 = vunpack.c.0.s8 %v218
    %v250 = vunpack.c.1.s8 %v218
    %vm251 = vcmp.ne.s32.totalorder %v219, 0
    %vm252 = vcmp.ne.s32.totalorder %v220, 0
    %vm253 = vcmp.ne.s32.totalorder %v221, 0
    %vm254 = vcmp.ne.s32.totalorder %v222, 0
    %vm255 = vcmp.ne.s32.totalorder %v223, 0
    %vm256 = vcmp.ne.s32.totalorder %v224, 0
    %vm257 = vcmp.ne.s32.totalorder %v225, 0
    %vm258 = vcmp.ne.s32.totalorder %v226, 0
    %vm259 = vcmp.ne.s32.totalorder %v227, 0
    %vm260 = vcmp.ne.s32.totalorder %v228, 0
    %vm261 = vcmp.ne.s32.totalorder %v229, 0
    %vm262 = vcmp.ne.s32.totalorder %v230, 0
    %vm263 = vcmp.ne.s32.totalorder %v231, 0
    %vm264 = vcmp.ne.s32.totalorder %v232, 0
    %vm265 = vcmp.ne.s32.totalorder %v233, 0
    %vm266 = vcmp.ne.s32.totalorder %v234, 0
    %vm267 = vcmp.ne.s32.totalorder %v235, 0
    %vm268 = vcmp.ne.s32.totalorder %v236, 0
    %vm269 = vcmp.ne.s32.totalorder %v237, 0
    %vm270 = vcmp.ne.s32.totalorder %v238, 0
    %vm271 = vcmp.ne.s32.totalorder %v239, 0
    %vm272 = vcmp.ne.s32.totalorder %v240, 0
    %vm273 = vcmp.ne.s32.totalorder %v241, 0
    %vm274 = vcmp.ne.s32.totalorder %v242, 0
    %vm275 = vcmp.ne.s32.totalorder %v243, 0
    %vm276 = vcmp.ne.s32.totalorder %v244, 0
    %vm277 = vcmp.ne.s32.totalorder %v245, 0
    %vm278 = vcmp.ne.s32.totalorder %v246, 0
    %vm279 = vcmp.ne.s32.totalorder %v247, 0
    %vm280 = vcmp.ne.s32.totalorder %v248, 0
    %vm281 = vcmp.ne.s32.totalorder %v249, 0
    %vm282 = vcmp.ne.s32.totalorder %v250, 0
    %v283 = vsel %vm251, %v67, 0.0
    %v284 = vsel %vm252, %v68, 0.0
    %v285 = vsel %vm253, %v69, 0.0
    %v286 = vsel %vm254, %v70, 0.0
    %v287 = vsel %vm255, %v71, 0.0
    %v288 = vsel %vm256, %v72, 0.0
    %v289 = vsel %vm257, %v73, 0.0
    %v290 = vsel %vm258, %v74, 0.0
    %v291 = vsel %vm259, %v75, 0.0
    %v292 = vsel %vm260, %v76, 0.0
    %v293 = vsel %vm261, %v77, 0.0
    %v294 = vsel %vm262, %v78, 0.0
    %v295 = vsel %vm263, %v79, 0.0
    %v296 = vsel %vm264, %v80, 0.0
    %v297 = vsel %vm265, %v81, 0.0
    %v298 = vsel %vm266, %v82, 0.0
    %v299 = vsel %vm267, %v83, 0.0
    %v300 = vsel %vm268, %v84, 0.0
    %v301 = vsel %vm269, %v85, 0.0
    %v302 = vsel %vm270, %v86, 0.0
    %v303 = vsel %vm271, %v87, 0.0
    %v304 = vsel %vm272, %v88, 0.0
    %v305 = vsel %vm273, %v89, 0.0
    %v306 = vsel %vm274, %v90, 0.0
    %v307 = vsel %vm275, %v91, 0.0
    %v308 = vsel %vm276, %v92, 0.0
    %v309 = vsel %vm277, %v93, 0.0
    %v310 = vsel %vm278, %v94, 0.0
    %v311 = vsel %vm279, %v95, 0.0
    %v312 = vsel %vm280, %v96, 0.0
    %v313 = vsel %vm281, %v97, 0.0
    %v314 = vsel %vm282, %v98, 0.0
    %v315 = vld [vmem:[#allocation2] sm:$0xff]
    %v316 = vld [vmem:[#allocation2 + $0x8] sm:$0xff]
    %v317 = vld [vmem:[#allocation2 + $0x10] sm:$0xff]
    %v318 = vld [vmem:[#allocation2 + $0x18] sm:$0xff]
    %v319 = vld [vmem:[%s3] sm:$0x1]
    %v321 = vperm.slane %v319, 0
    %323 = vmatpush.xpose.msra.mxu0 %v313
    %324 = vmatpush.xpose.msra.mxu0 %v311
    %325 = vmatpush.xpose.msra.mxu0 %v309
    %326 = vmatpush.xpose.msra.mxu0 %v307
    %327 = vmatpush.xpose.msra.mxu0 %v305
    %328 = vmatpush.xpose.msra.mxu0 %v303
    %329 = vmatpush.xpose.msra.mxu0 %v301
    %330 = vmatpush.xpose.msra.mxu0 %v299
    %331 = vmatpush.xpose.msra.mxu0 %v297
    %332 = vmatpush.xpose.msra.mxu0 %v295
    %333 = vmatpush.xpose.msra.mxu0 %v293
    %334 = vmatpush.xpose.msra.mxu0 %v291
    %335 = vmatpush.xpose.msra.mxu0 %v289
    %336 = vmatpush.xpose.msra.mxu0 %v287
    %337 = vmatpush.xpose.msra.mxu0 %v285
    %338 = vmatpush.xpose.msra.mxu0 %v283
    %339 = vmatmul.f32.gmra.mxu0 %v315
    %v340 = vpop.f32.mrf.mxu0
    %v341 = vadd.f32 %v321, %v340
    %342 = vmatmul.f32.gmra.mxu0 %v317
    %v343 = vpop.f32.mrf.mxu0
    %v344 = vadd.f32 %v321, %v343
    %345 = vdwg.mxu0
    %346 = vmatpush.xpose.msra.mxu0 %v314
    %347 = vmatpush.xpose.msra.mxu0 %v312
    %348 = vmatpush.xpose.msra.mxu0 %v310
    %349 = vmatpush.xpose.msra.mxu0 %v308
    %350 = vmatpush.xpose.msra.mxu0 %v306
    %351 = vmatpush.xpose.msra.mxu0 %v304
    %352 = vmatpush.xpose.msra.mxu0 %v302
    %353 = vmatpush.xpose.msra.mxu0 %v300
    %354 = vmatpush.xpose.msra.mxu0 %v298
    %355 = vmatpush.xpose.msra.mxu0 %v296
    %356 = vmatpush.xpose.msra.mxu0 %v294
    %357 = vmatpush.xpose.msra.mxu0 %v292
    %358 = vmatpush.xpose.msra.mxu0 %v290
    %359 = vmatpush.xpose.msra.mxu0 %v288
    %360 = vmatpush.xpose.msra.mxu0 %v286
    %361 = vmatpush.xpose.msra.mxu0 %v284
    %362 = vmatmul.f32.gmra.mxu0 %v316
    %v363 = vpop.f32.mrf.mxu0
    %v364 = vadd.f32 %v341, %v363
    %365 = vmatmul.f32.gmra.mxu0 %v318
    %v366 = vpop.f32.mrf.mxu0
    %v367 = vadd.f32 %v344, %v366
    %368 = vdwg.mxu0
    %369 = vst [vmem:[#allocation8] sm:$0xff] %v364
    %370 = vst [vmem:[#allocation8 + $0x8] sm:$0xff] %v367
    // Predicated region
    $region30: #{tpu_custom_call.1} parent=1 // pred_check
      _
    $region31: #{tpu_custom_call.1} parent=1 // pred_check_branch
      %372 = sbr.rel (0) target = $region33
    $region32: #{tpu_custom_call.1} parent=1 // pred_region
      %374 = vsyncadd [#allocation4], 0
      %s375 = sshll.u32 [#allocation8], 4
      %s376 = int_to_ptr.vmem [resolvable:$true] %s375
      %s377 = sshll.u32 %s4, 4
      %s378 = int_to_ptr.hbm [resolvable:$true] %s377
      %383 = dma.vmem_to_hbm [thread:$0]  %s376, 256, %s378, [#allocation4], 128, 128, 8
    $region33: #{tpu_custom_call.1} parent=1 // pred_fallthru
      _
    // Predicated region
    $region34: #{tpu_custom_call.1} parent=1 // pred_check
      _
    $region35: #{tpu_custom_call.1} parent=1 // pred_check_branch
      %385 = sbr.rel (0) target = $region37
    $region36: #{tpu_custom_call.1} parent=1 // pred_region
      %387 = dma.done [#allocation4], 256
    $region37: #{tpu_custom_call.1} parent=1 // pred_fallthru
      _
    %388 = vsyncpa [#allocation3], 1
    %389 = vsyncpa [#allocation6], 1
    %390 = vsyncpa [#allocation4], 1

</llo_original>
